<compile_context>
chip_gen: v7x
topology: tpu7x:2x2x1
jax: 0.10.0
libtpu: 0.0.40
codegen_flags: <defaults>
</compile_context>

<pallas_src>
import functools

import jax
import jax.numpy as jnp
from jax.experimental import pallas as pl
from jax.experimental.pallas import tpu as pltpu


# --------------------------------------------------------------------------
# Hardware / budget helpers
# --------------------------------------------------------------------------
def _physical_vmem_bytes():
    try:
        phys = int(pltpu.get_tpu_info().vmem_capacity_bytes)
        if phys > 0:
            return phys
    except Exception:
        pass
    return 64 << 20  # conservative fallback (v7x per-TC VMEM)


def _sublane_multiple(dtype):
    bits = jnp.dtype(dtype).itemsize * 8
    return max(8, 256 // bits)  # 8 (f32), 16 (bf16), 32 (int8/fp8)


def _divisor_candidates(n, mult):
    """Divisors of n that are multiples of mult (plus n itself), descending."""
    cands = {n}
    t = mult
    while t < n:
        if n % t == 0:
            cands.add(t)
        t += mult
    return sorted(cands, reverse=True)


def _vmem_limit_bytes(footprint, phys):
    limit = max(footprint + (4 << 20), 32 << 20)
    return int(min(limit, phys - (1 << 20)))


def _select_norm_tile(N, D, dtype, budget):
    db = jnp.dtype(dtype).itemsize
    sub = _sublane_multiple(dtype)
    cands = sorted(
        set(_divisor_candidates(N, sub)) | set(_divisor_candidates(N, 8)),
        reverse=True)
    for trn in cands:
        # in + out double-buffered, plus ~3 f32 temporaries of the tile.
        fp = 4 * trn * D * db + 3 * trn * D * 4
        if fp <= budget:
            return trn, fp
    trn = cands[-1]
    return trn, 4 * trn * D * db + 3 * trn * D * 4


def _select_loss_tiles(B, N, D, dtype, budget):
    db = jnp.dtype(dtype).itemsize
    sub = _sublane_multiple(dtype)
    # tr must divide B (partner-block mapping); tc must divide N.
    tr_cands = sorted(
        set(_divisor_candidates(B, sub)) | set(_divisor_candidates(B, 8)),
        reverse=True)
    tc_cands = sorted(
        set(_divisor_candidates(N, 128)) | set(_divisor_candidates(N, 8)),
        reverse=True)

    def footprint(tr, tc):
        streams = 2 * db * D * (2 * tr + tc)   # double-buffered zr, zp, zc tiles
        temps = 2 * 4 * tr * tc                # s / exp(s) f32 temporaries
        small = 4 * tr + 2 * 4 * tr            # d_acc scratch + out blocks
        return streams + temps + small

    # Maximize tr first (cuts the (N/tr)-fold HBM re-streaming of zn), then
    # tc (collapses the reduction grid to a single step when zn's column
    # stream fits in VMEM).
    for tr in tr_cands:
        for tc in tc_cands:
            fp = footprint(tr, tc)
            if fp <= budget:
                return tr, tc, fp
    tr, tc = tr_cands[-1], tc_cands[-1]
    return tr, tc, footprint(tr, tc)


# --------------------------------------------------------------------------
# Kernel 1: row-wise L2 normalization (rsqrt on EUP, multiply on VPU).
# --------------------------------------------------------------------------
def _normalize_kernel(z_ref, zn_ref, *, eps):
    z = z_ref[...].astype(jnp.float32)
    sumsq = jnp.sum(z * z, axis=-1, keepdims=True)
    inv = jax.lax.rsqrt(jnp.maximum(sumsq, eps * eps))  # == 1/max(||z||, eps)
    zn_ref[...] = (z * inv).astype(zn_ref.dtype)


# --------------------------------------------------------------------------
# Kernel 2 (single pass, C == 1):  l_r = log(d_r) - (z_r . z_pair)/tau
#   d_r = sum_{c != r} exp((z_r . z_c)/tau)
# --------------------------------------------------------------------------
def _loss_rows_single_kernel(zr_ref, zc_ref, zp_ref, out_ref, *, inv_tau):
    i = pl.program_id(0)
    zr = zr_ref[...]
    # (tr, D) x (N, D) contracted on D -> (tr, N); no explicit transpose
    # (same NT form as the production flash-attention kernels).
    s = jax.lax.dot_general(
        zr, zc_ref[...],
        dimension_numbers=(((1,), (1,)), ((), ())),
        preferred_element_type=jnp.float32,
    )
    e = jnp.exp(s * inv_tau)
    tr, tc = e.shape
    # Exact self-similarity removal via compare+select (VALU slack; robust for
    # bf16 inputs / small tau, unlike an analytic exp(1/tau) subtraction).
    row_ids = jax.lax.broadcasted_iota(jnp.int32, (tr, tc), 0) + i * tr
    col_ids = jax.lax.broadcasted_iota(jnp.int32, (tr, tc), 1)
    e = jnp.where(row_ids == col_ids, 0.0, e)
    d = jnp.sum(e, axis=-1, keepdims=True)
    # Positive-pair logit: row-wise dot with the partner half (O(tr*D) f32);
    # the exp/log pair cancels analytically.
    num_logit = jnp.sum(
        zr.astype(jnp.float32) * zp_ref[...].astype(jnp.float32),
        axis=-1, keepdims=True) * inv_tau
    out_ref[...] = jnp.log(d) - num_logit


# --------------------------------------------------------------------------
# Kernel 2 (tiled reduction, C > 1), column axis is the last / "arbitrary"
# grid axis; per-row denominators accumulate in VMEM scratch.
# --------------------------------------------------------------------------
def _loss_rows_tiled_kernel(zr_ref, zc_ref, zp_ref, out_ref, d_acc, *, inv_tau):
    i = pl.program_id(0)
    j = pl.program_id(1)

    @pl.when(j == 0)
    def _init():
        d_acc[...] = jnp.zeros_like(d_acc)

    zr = zr_ref[...]
    s = jax.lax.dot_general(
        zr, zc_ref[...],
        dimension_numbers=(((1,), (1,)), ((), ())),
        preferred_element_type=jnp.float32,
    )
    e = jnp.exp(s * inv_tau)
    tr, tc = e.shape
    row_ids = jax.lax.broadcasted_iota(jnp.int32, (tr, tc), 0) + i * tr
    col_ids = jax.lax.broadcasted_iota(jnp.int32, (tr, tc), 1) + j * tc
    e = jnp.where(row_ids == col_ids, 0.0, e)
    d_acc[...] += jnp.sum(e, axis=-1, keepdims=True)

    @pl.when(j == pl.num_programs(1) - 1)
    def _finalize():
        num_logit = jnp.sum(
            zr.astype(jnp.float32) * zp_ref[...].astype(jnp.float32),
            axis=-1, keepdims=True) * inv_tau
        out_ref[...] = jnp.log(d_acc[...]) - num_logit


# --------------------------------------------------------------------------
# Wrapper
# --------------------------------------------------------------------------
def contrastive_loss(z1, z2, tau):
    B, D = z1.shape
    assert z2.shape == (B, D)
    assert z1.dtype == z2.dtype
    assert B % 8 == 0, "batch must be a multiple of 8 (TPU sublane tiling)"
    N = 2 * B
    dtype = z1.dtype

    phys = _physical_vmem_bytes()
    budget = int(phys * 0.40)

    # Layout-only stack at the pallas_call boundary (no in-kernel concat).
    z = jnp.concatenate([z1, z2], axis=0)

    # ---- kernel 1: normalize rows (pure streaming pass) --------------------
    trn, norm_fp = _select_norm_tile(N, D, dtype, budget)
    zn = pl.pallas_call(
        functools.partial(_normalize_kernel, eps=1e-12),
        out_shape=jax.ShapeDtypeStruct((N, D), dtype),
        grid_spec=pltpu.PrefetchScalarGridSpec(
            num_scalar_prefetch=0,
            grid=(N // trn,),
            in_specs=[pl.BlockSpec((trn, D), lambda i: (i, 0))],
            out_specs=pl.BlockSpec((trn, D), lambda i: (i, 0)),
        ),
        compiler_params=pltpu.CompilerParams(
            dimension_semantics=("parallel",),
            vmem_limit_bytes=_vmem_limit_bytes(norm_fp, phys)),
    )(z)
    # TODO(synk): on v5e, casting zn to bf16 here would halve HBM streaming of
    # the column operand; kept in the input dtype for exactness.

    # ---- kernel 2: tiled per-row loss terms --------------------------------
    tr, tc, loss_fp = _select_loss_tiles(B, N, D, dtype, budget)
    R = N // tr
    C = N // tc
    half = B // tr  # block offset of the positive-pair half

    inv_tau = 1.0 / float(tau)
    out_shape = jax.ShapeDtypeStruct((N, 1), jnp.float32)
    vmem_limit = _vmem_limit_bytes(loss_fp, phys)

    if C == 1:
        l_rows = pl.pallas_call(
            functools.partial(_loss_rows_single_kernel, inv_tau=inv_tau),
            out_shape=out_shape,
            grid_spec=pltpu.PrefetchScalarGridSpec(
                num_scalar_prefetch=0,
                grid=(R,),
                in_specs=[
                    pl.BlockSpec((tr, D), lambda i: (i, 0)),               # row tile
                    pl.BlockSpec((N, D), lambda i: (0, 0)),                # full columns
                    pl.BlockSpec((tr, D), lambda i: ((i + half) % R, 0)),  # positive pair
                ],
                out_specs=pl.BlockSpec((tr, 1), lambda i: (i, 0)),
            ),
            compiler_params=pltpu.CompilerParams(
                dimension_semantics=("parallel",),
                vmem_limit_bytes=vmem_limit),
        )(zn, zn, zn)
    else:
        l_rows = pl.pallas_call(
            functools.partial(_loss_rows_tiled_kernel, inv_tau=inv_tau),
            out_shape=out_shape,
            grid_spec=pltpu.PrefetchScalarGridSpec(
                num_scalar_prefetch=0,
                grid=(R, C),
                in_specs=[
                    pl.BlockSpec((tr, D), lambda i, j: (i, 0)),                # row tile
                    pl.BlockSpec((tc, D), lambda i, j: (j, 0)),                # column tile
                    pl.BlockSpec((tr, D), lambda i, j: ((i + half) % R, 0)),   # positive pair
                ],
                out_specs=pl.BlockSpec((tr, 1), lambda i, j: (i, 0)),
                scratch_shapes=[pltpu.VMEM((tr, 1), jnp.float32)],
            ),
            compiler_params=pltpu.CompilerParams(
                dimension_semantics=("parallel", "arbitrary"),
                vmem_limit_bytes=vmem_limit),
        )(zn, zn, zn)

    # Tiny O(2B) epilogue stays in the wrapper so the row axis can remain
    # "parallel" (a racy cross-row scalar accumulator would forbid it).
    return jnp.sum(l_rows) / N


# --------------------------------------------------------------------------
# Pure-JAX reference mirroring the PyTorch forward, for correctness check.
# --------------------------------------------------------------------------
def _reference_loss(z1, z2, tau):
    eps = 1e-12

    def norm(z):
        return z / jnp.maximum(jnp.linalg.norm(z, axis=-1, keepdims=True), eps)

    z = jnp.concatenate([norm(z1), norm(z2)], axis=0)
    S = jnp.exp(jnp.matmul(z, z.T, precision="highest") / tau)
    N = S.shape[0]
    S = S * (1.0 - jnp.eye(N, dtype=S.dtype))
    B = z1.shape[0]
    i = jnp.arange(B)
    n = jnp.concatenate([S[i, i + B], S[i + B, i]])
    d = jnp.sum(S, axis=-1)
    l = -jnp.log(n / d)
    return jnp.sum(l) / (2 * B)


if __name__ == "__main__":
    tau = 0.5
    B, D = 8, 32

    key = jax.random.PRNGKey(0)
    k1, k2 = jax.random.split(key)
    z1 = jax.random.normal(k1, (B, D), dtype=jnp.float32)
    z2 = jax.random.normal(k2, (B, D), dtype=jnp.float32)

    loss = contrastive_loss(z1, z2, tau)
    loss = jax.block_until_ready(loss)

    ref = _reference_loss(z1, z2, tau)
    assert jnp.allclose(loss, ref, rtol=1e-5, atol=1e-5), (loss, ref)

    print("KERNEL_OK")
</pallas_src>

<mosaic_0001>
module attributes {stable_mosaic.version = 11 : i64} {
  func.func @_normalize_kernel(%arg0: i32, %arg1: memref<16x32xf32, #tpu.memory_space<vmem>>, %arg2: memref<16x32xf32, #tpu.memory_space<vmem>>) attributes {dimension_semantics = [#tpu.dimension_semantics<parallel>], iteration_bounds = array<i64: 1>, scalar_prefetch = 0 : i64, scratch_operands = 0 : i64, tpu.core_type = #tpu.core_type<tc>, window_params = [{transform_indices = @transform_0, window_bounds = array<i64: 16, 32>}, {transform_indices = @transform_1, window_bounds = array<i64: 16, 32>}]} {
    %c0 = arith.constant 0 : index
    %c0_0 = arith.constant 0 : index
    %0 = vector.load %arg1[%c0, %c0_0] : memref<16x32xf32, #tpu.memory_space<vmem>>, vector<16x32xf32>
    %1 = arith.mulf %0, %0 : vector<16x32xf32>
    %cst = arith.constant dense<0.000000e+00> : vector<16xf32>
    %2 = vector.multi_reduction <add>, %1, %cst [1] : vector<16x32xf32> to vector<16xf32>
    %3 = vector.shape_cast %2 : vector<16xf32> to vector<16x1xf32>
    %cst_1 = arith.constant 1.000000e-24 : f32
    %4 = vector.broadcast %cst_1 : f32 to vector<16x1xf32>
    %5 = arith.maximumf %3, %4 : vector<16x1xf32>
    %6 = math.rsqrt %5 : vector<16x1xf32>
    %7 = vector.broadcast %6 : vector<16x1xf32> to vector<16x32xf32>
    %8 = arith.mulf %0, %7 : vector<16x32xf32>
    %c0_2 = arith.constant 0 : index
    %c0_3 = arith.constant 0 : index
    %9 = vector.load %arg2[%c0_2, %c0_3] : memref<16x32xf32, #tpu.memory_space<vmem>>, vector<16x32xf32>
    tpu.vector_store %arg2[%c0_2, %c0_3], %8 {strides = array<i32>} : memref<16x32xf32, #tpu.memory_space<vmem>>, vector<16x32xf32>,
    return
  }
  func.func @transform_0(%arg0: i32) -> (i32, i32) {
    %c0_i32 = arith.constant 0 : i32
    %c0_i32_0 = arith.constant 0 : i32
    return %arg0, %c0_i32 : i32, i32
  }
  func.func @transform_1(%arg0: i32) -> (i32, i32) {
    %c0_i32 = arith.constant 0 : i32
    %c0_i32_0 = arith.constant 0 : i32
    return %arg0, %c0_i32 : i32, i32
  }
}

</mosaic_0001>

<llo_original>
// kernel: tpu_custom_call.1
$region0: #{tpu_custom_call.1}
  #allocation0 [shape = 'u32[]', space=smem, size = 0x4, offset = 0x4, fixed_abs, tag = 'smem constant byte address 0x4 - core index']
  #allocation1 [shape = 'u32[144,128]{1,0:T(1,128)}', space=vmem, size = 0x12000, scoped, tag = 'internal scratch']
  %s0 = inlined_call_operand.hbm [shape: f32[16,32], index: 0, kind: input, shape index: {}]
  %s1 = inlined_call_operand.hbm [shape: f32[16,32], index: 1, kind: output, shape index: {}]
  %s2 = sld [smem:[#allocation0]]
  $region18: #{tpu_custom_call.1} parent=0
    _
  %s4 = ssub.s32 1, %s2
  %s5 = scalar_select 0, %s4, %s2
  $region1: #{tpu_custom_call.1} parent=0
    #allocation2 [shape = 'u8[8192]{0}', space=vmem, size = 0x2000, scoped, tag = 'input window, operand 0, single buffered']
    #allocation3 [shape = 's32[1]{0}', space=sflag, size = 0x4, scoped, tag = 'scoped memory for tpu_custom_call.1']
    #allocation4 [shape = 's32[1]{0}', space=sflag, size = 0x4, scoped, tag = 'scoped memory for tpu_custom_call.1']
    #allocation5 [shape = 'u8[8192]{0}', space=vmem, size = 0x2000, scoped, tag = 'output window, operand 0, single buffered']
    %6 = vsyncpa [#allocation3], 0
    %7 = vsyncpa [#allocation4], 0
    // Predicated region
    $region2: #{tpu_custom_call.1} parent=1 // pred_check
      _
    $region3: #{tpu_custom_call.1} parent=1 // pred_check_branch
      %9 = sbr.rel (0) target = $region5
    $region4: #{tpu_custom_call.1} parent=1 // pred_region
      %s11 = ssub.s32 256, 256
      %12 = vsyncadd [#allocation3], %s11
      %s13 = sshll.u32 [#allocation2], 4
      %s14 = int_to_ptr.vmem [resolvable:$true] %s13
      %19 = dma.hbm_to_vmem [thread:$0]  %s0, 256, %s14, [#allocation3], 128, 128, 8
    $region5: #{tpu_custom_call.1} parent=1 // pred_fallthru
      _
    // Predicated region
    $region6: #{tpu_custom_call.1} parent=1 // pred_check
      _
    $region7: #{tpu_custom_call.1} parent=1 // pred_check_branch
      %21 = sbr.rel (0) target = $region9
    $region8: #{tpu_custom_call.1} parent=1 // pred_region
      %22 = dma.done [#allocation3], 256
    $region9: #{tpu_custom_call.1} parent=1 // pred_fallthru
      _
    %v23 = vld [vmem:[#allocation2] sm:$0xff]
    %v24 = vld [vmem:[#allocation2 + $0x8] sm:$0xff]
    %v25 = vmul.f32 %v23, %v23
    %v26 = vmul.f32 %v24, %v24
    %vm27 = vcmask 261120
    %v28 = vsel %vm27, %v25, 0.0
    %29 = vadd.xlane.f32.xlu0 %v28
    %v30 = vpop.xlane.xlu0 %29
    %v31 = vsel %vm27, %v26, 0.0
    %32 = vadd.xlane.f32.xlu0 %v31
    %v33 = vpop.xlane.xlu0 %32
    %v34 = vmax.f32 %v30, 1e-24
    %v35 = vmax.f32 %v33, 1e-24
    %v36 = vrsqrt.pop %v34
    %v37 = vrsqrt.pop %v35
    %v38 = vmul.f32 %v23, %v36
    %v39 = vmul.f32 %v24, %v37
    %40 = vst.msk [vmem:[#allocation5] sm:$0xff] %vm27, %v38
    %41 = vst.msk [vmem:[#allocation5 + $0x8] sm:$0xff] %vm27, %v39
    // Predicated region
    $region10: #{tpu_custom_call.1} parent=1 // pred_check
      _
    $region11: #{tpu_custom_call.1} parent=1 // pred_check_branch
      %43 = sbr.rel (0) target = $region13
    $region12: #{tpu_custom_call.1} parent=1 // pred_region
      %s45 = ssub.s32 256, 256
      %46 = vsyncadd [#allocation4], %s45
      %s47 = sshll.u32 [#allocation5], 4
      %s48 = int_to_ptr.vmem [resolvable:$true] %s47
      %53 = dma.vmem_to_hbm [thread:$0]  %s48, 256, %s1, [#allocation4], 128, 128, 8
    $region13: #{tpu_custom_call.1} parent=1 // pred_fallthru
      _
    // Predicated region
    $region14: #{tpu_custom_call.1} parent=1 // pred_check
      _
    $region15: #{tpu_custom_call.1} parent=1 // pred_check_branch
      %55 = sbr.rel (0) target = $region17
    $region16: #{tpu_custom_call.1} parent=1 // pred_region
      %56 = dma.done [#allocation4], 256
    $region17: #{tpu_custom_call.1} parent=1 // pred_fallthru
      _
    %57 = vsyncpa [#allocation3], 1
    %58 = vsyncpa [#allocation4], 1

</llo_original>
